<compile_context>
chip_gen: v7x
topology: tpu7x:2x2x1
jax: 0.10.0
libtpu: 0.0.40
codegen_flags: <defaults>
</compile_context>

<pallas_src>
import functools

import jax
import jax.numpy as jnp
from jax import lax
from jax.experimental import pallas as pl
from jax.experimental.pallas import tpu as pltpu


_VMEM_LIMIT = 32 * 1024 * 1024  # explicit scoped-VMEM budget (safe on v5e/v6e/v7x)


def _round_up(v, m):
    return ((v + m - 1) // m) * m


def _nt_dot(a, b):
    # (K, A) x (K, B) -> (A, B): contract over the leading axis (stays on MXU).
    return lax.dot_general(a, b, (((0,), (0,)), ((), ())),
                           preferred_element_type=jnp.float32)


# -----------------------------------------------------------------------------
# Kernel 1: sparse GINE aggregation
#   agg[d] += relu(x[s] + edge_attr[e])  for every edge e = (s -> d)
# Grid over edge tiles; src/dst live in SMEM (scalar prefetch); x and the (N,D)
# accumulator stay resident in VMEM across the whole grid.
# -----------------------------------------------------------------------------
def _aggregate_kernel(num_edges, edge_tile,
                      src_ref, dst_ref,        # scalar-prefetch (SMEM)
                      x_ref, eattr_ref,        # VMEM inputs
                      agg_ref):                # VMEM output (resident accumulator)
    t = pl.program_id(0)

    @pl.when(t == 0)
    def _init():
        agg_ref[...] = jnp.zeros_like(agg_ref)

    base = t * edge_tile

    def body(i, carry):
        e = base + i

        @pl.when(e < num_edges)          # skip padded edges
        def _edge():
            s = src_ref[e]
            d = dst_ref[e]
            msg = jnp.maximum(
                x_ref[pl.ds(s, 1), :] + eattr_ref[pl.ds(i, 1), :], 0.0)
            agg_ref[pl.ds(d, 1), :] = agg_ref[pl.ds(d, 1), :] + msg

        return carry

    lax.fori_loop(0, edge_tile, body, 0)


def _aggregate(x_p, eattr_p, src_p, dst_p, num_edges, edge_tile):
    n_p, d_p = x_p.shape
    e_p = eattr_p.shape[0]
    grid = (e_p // edge_tile,)
    kernel = functools.partial(_aggregate_kernel, num_edges, edge_tile)
    flops = 2 * num_edges * d_p
    bytes_accessed = 4 * (2 * n_p * d_p + e_p * d_p) + 8 * e_p
    return pl.pallas_call(
        kernel,
        out_shape=jax.ShapeDtypeStruct((n_p, d_p), jnp.float32),
        grid_spec=pltpu.PrefetchScalarGridSpec(
            num_scalar_prefetch=2,
            grid=grid,
            in_specs=[
                # node features: resident across all edge tiles
                pl.BlockSpec((n_p, d_p), lambda t, src, dst: (0, 0)),
                # edge features: streamed tile-by-tile (auto double-buffered)
                pl.BlockSpec((edge_tile, d_p), lambda t, src, dst: (t, 0)),
            ],
            # accumulator output revisited every step -> stays in VMEM
            out_specs=pl.BlockSpec((n_p, d_p), lambda t, src, dst: (0, 0)),
        ),
        compiler_params=pltpu.CompilerParams(
            dimension_semantics=("arbitrary",),      # reduction into one output
            vmem_limit_bytes=_VMEM_LIMIT,
        ),
        cost_estimate=pl.CostEstimate(flops=flops, transcendentals=0,
                                      bytes_accessed=bytes_accessed),
    )(src_p, dst_p, x_p, eattr_p)


# -----------------------------------------------------------------------------
# Kernel 2: node update = GINE combine + MLP + graph LayerNorm (+ residual) + ReLU
# -----------------------------------------------------------------------------
def _node_update_kernel(num_graphs, feat_dim, use_residual,
                        n2g_ref, h_ref, agg_ref, res_ref,
                        eps_ref, wa_ref, ba_ref, wb_ref, bb_ref,
                        gamma_ref, beta_ref,
                        out_ref):
    h = h_ref[...]                                   # (Np, Dp)
    n_p, d_p = h.shape
    eps = eps_ref[0, 0]                              # SMEM scalar

    # GINEConv combine + MLP(Linear -> ReLU -> Linear)
    z = (1.0 + eps) * h + agg_ref[...]
    z = jnp.maximum(
        jnp.dot(z, wa_ref[...], preferred_element_type=jnp.float32) + ba_ref[...],
        0.0)
    z = jnp.dot(z, wb_ref[...], preferred_element_type=jnp.float32) + bb_ref[...]

    # graph-wise LayerNorm: mean/var over all nodes and all features per graph.
    # Padded node rows carry node2graph == num_graphs -> all-zero one-hot row,
    # so they never contribute to the statistics.
    g_oh = (lax.broadcasted_iota(jnp.int32, (n_p, num_graphs), 1)
            == n2g_ref[...]).astype(jnp.float32)                       # (Np, G)
    cnt = _nt_dot(g_oh, jnp.ones((n_p, 1), jnp.float32))               # (G, 1)
    denom = jnp.maximum(cnt, 1.0) * jnp.float32(feat_dim)
    # fused statistics: one matmul gives per-graph [sum(z), sum(z*z)]
    stats = _nt_dot(g_oh, jnp.concatenate([z, z * z], axis=-1))        # (G, 2*Dp)
    mean_g = jnp.sum(stats[:, :d_p], axis=-1, keepdims=True) / denom   # (G, 1)
    ex2_g = jnp.sum(stats[:, d_p:], axis=-1, keepdims=True) / denom    # (G, 1)
    var_g = jnp.maximum(ex2_g - mean_g * mean_g, 0.0)
    rstd_g = lax.rsqrt(var_g + 1e-5)
    # broadcast per-graph scale/shift back to nodes
    rstd_n = jnp.dot(g_oh, rstd_g, preferred_element_type=jnp.float32)           # (Np,1)
    shift_n = jnp.dot(g_oh, mean_g * rstd_g, preferred_element_type=jnp.float32)  # (Np,1)
    z = (z * rstd_n - shift_n) * gamma_ref[...] + beta_ref[...]

    if use_residual:
        z = (z + res_ref[...]) * 0.5
    out_ref[...] = jnp.maximum(z, 0.0)


def _node_update(h_p, agg_p, res_p, n2g_p, p, num_graphs, feat_dim, use_residual):
    n_p, d_p = h_p.shape
    vmem = pl.BlockSpec(memory_space=pltpu.MemorySpace.VMEM)
    smem = pl.BlockSpec(memory_space=pltpu.MemorySpace.SMEM)
    kernel = functools.partial(_node_update_kernel, num_graphs, feat_dim,
                               use_residual)
    flops = (4 * n_p * d_p * d_p                       # two (Np,Dp)@(Dp,Dp) matmuls
             + 2 * n_p * num_graphs * (2 * d_p + 3)    # LN one-hot contractions
             + 12 * n_p * d_p)                         # elementwise
    bytes_accessed = 4 * (4 * n_p * d_p + 2 * d_p * d_p + 4 * d_p + n_p)
    return pl.pallas_call(
        kernel,
        out_shape=jax.ShapeDtypeStruct((n_p, d_p), jnp.float32),
        in_specs=[vmem, vmem, vmem, vmem, smem,
                  vmem, vmem, vmem, vmem, vmem, vmem],
        out_specs=vmem,
        compiler_params=pltpu.CompilerParams(vmem_limit_bytes=_VMEM_LIMIT),
        cost_estimate=pl.CostEstimate(flops=flops, transcendentals=num_graphs,
                                      bytes_accessed=bytes_accessed),
    )(n2g_p, h_p, agg_p, res_p, p["eps"],
      p["wa"], p["ba"], p["wb"], p["bb"], p["gamma"], p["beta"])


# -----------------------------------------------------------------------------
# Wrapper: padding / plumbing around the two kernels.
# -----------------------------------------------------------------------------
def residual_block(x, edge_index, edge_attr, node2graph, num_graphs, params,
                   *, edge_tile=256):
    n, d = x.shape
    e = edge_attr.shape[0]

    d_p = _round_up(max(d, 128), 128)        # lane-dense feature dim
    n_p = _round_up(max(n, 8), 8)            # sublane-aligned node rows
    edge_tile = max(8, _round_up(edge_tile, 8))
    e_p = _round_up(max(e, edge_tile), edge_tile)

    def pad2(a, r, c):
        return jnp.pad(a, ((0, r - a.shape[0]), (0, c - a.shape[1])))

    x_p = pad2(x.astype(jnp.float32), n_p, d_p)
    eattr_p = pad2(edge_attr.astype(jnp.float32), e_p, d_p)
    src_p = jnp.pad(edge_index[0].astype(jnp.int32), (0, e_p - e))
    dst_p = jnp.pad(edge_index[1].astype(jnp.int32), (0, e_p - e))
    # padded node rows get a non-existent graph id -> excluded from LayerNorm stats
    n2g_p = jnp.pad(node2graph.astype(jnp.int32), (0, n_p - n),
                    constant_values=num_graphs).reshape(n_p, 1)

    def pad_params(sfx):
        return {
            "eps": params[f"eps{sfx}"].astype(jnp.float32),
            "wa": pad2(params[f"w{sfx}a"].astype(jnp.float32), d_p, d_p),
            "ba": pad2(params[f"b{sfx}a"].astype(jnp.float32), 1, d_p),
            "wb": pad2(params[f"w{sfx}b"].astype(jnp.float32), d_p, d_p),
            "bb": pad2(params[f"b{sfx}b"].astype(jnp.float32), 1, d_p),
            "gamma": pad2(params[f"gamma{sfx}"].astype(jnp.float32), 1, d_p),
            "beta": pad2(params[f"beta{sfx}"].astype(jnp.float32), 1, d_p),
        }

    p1, p2 = pad_params(1), pad_params(2)

    # conv1 -> norm1 -> relu
    agg1 = _aggregate(x_p, eattr_p, src_p, dst_p, e, edge_tile)
    h1 = _node_update(x_p, agg1, x_p, n2g_p, p1, num_graphs, d,
                      use_residual=False)
    # conv2 -> norm2 -> (out + x) / 2 -> relu
    agg2 = _aggregate(h1, eattr_p, src_p, dst_p, e, edge_tile)
    out_p = _node_update(h1, agg2, x_p, n2g_p, p2, num_graphs, d,
                         use_residual=True)

    return out_p[:n, :d]


# ---------------- pure-JAX reference (for verification only) ----------------
def _gine_ref(h, src, dst, eattr, eps, wa, ba, wb, bb):
    msg = jax.nn.relu(h[src] + eattr)
    agg = jnp.zeros_like(h).at[dst].add(msg)
    z = (1.0 + eps) * h + agg
    return jax.nn.relu(z @ wa + ba) @ wb + bb


def _ln_ref(h, n2g, num_graphs, gamma, beta):
    d = h.shape[-1]
    cnt = jnp.zeros((num_graphs,), h.dtype).at[n2g].add(1.0)
    norm = jnp.maximum(cnt, 1.0) * d
    s = jnp.zeros((num_graphs, d), h.dtype).at[n2g].add(h)
    mean = s.sum(-1) / norm
    xc = h - mean[n2g][:, None]
    v = jnp.zeros((num_graphs, d), h.dtype).at[n2g].add(xc * xc)
    var = v.sum(-1) / norm
    return xc / jnp.sqrt(var + 1e-5)[n2g][:, None] * gamma + beta


def _ref(x, edge_index, edge_attr, n2g, num_graphs, p):
    src, dst = edge_index[0], edge_index[1]
    h = _gine_ref(x, src, dst, edge_attr, p["eps1"][0, 0],
                  p["w1a"], p["b1a"][0], p["w1b"], p["b1b"][0])
    h = jax.nn.relu(_ln_ref(h, n2g, num_graphs, p["gamma1"][0], p["beta1"][0]))
    h = _gine_ref(h, src, dst, edge_attr, p["eps2"][0, 0],
                  p["w2a"], p["b2a"][0], p["w2b"], p["b2b"][0])
    h = _ln_ref(h, n2g, num_graphs, p["gamma2"][0], p["beta2"][0])
    return jax.nn.relu((h + x) * 0.5)


if __name__ == "__main__":
    key = jax.random.PRNGKey(0)
    node_dim = 32                 # node_dim == edge_dim (GINEConv without edge proj)
    num_graphs = 2
    nodes_per_graph = 7
    num_nodes = num_graphs * nodes_per_graph      # 14 -> padded to 16 rows
    edges_per_graph = 11
    num_edges = num_graphs * edges_per_graph      # 22 -> padded to 24 (edge_tile=8)

    keys = jax.random.split(key, 16)
    x = jax.random.normal(keys[0], (num_nodes, node_dim), jnp.float32)
    edge_attr = jax.random.normal(keys[1], (num_edges, node_dim), jnp.float32)

    # deterministic edges, kept within each graph
    srcs, dsts = [], []
    for g in range(num_graphs):
        lo = g * nodes_per_graph
        srcs.append(jax.random.randint(keys[2 + g], (edges_per_graph,),
                                       lo, lo + nodes_per_graph))
        dsts.append(jax.random.randint(keys[4 + g], (edges_per_graph,),
                                       lo, lo + nodes_per_graph))
    edge_index = jnp.stack(
        [jnp.concatenate(srcs), jnp.concatenate(dsts)]).astype(jnp.int32)
    node2graph = jnp.repeat(jnp.arange(num_graphs, dtype=jnp.int32),
                            nodes_per_graph)

    def lin(k, fan_in, fan_out):
        return (jax.random.normal(k, (fan_in, fan_out), jnp.float32)
                / jnp.sqrt(float(fan_in)))

    params = {
        "eps1": jnp.zeros((1, 1), jnp.float32),          # train_eps=True, init 0
        "w1a": lin(keys[6], node_dim, node_dim),
        "b1a": 0.01 * jnp.ones((1, node_dim), jnp.float32),
        "w1b": lin(keys[7], node_dim, node_dim),
        "b1b": -0.01 * jnp.ones((1, node_dim), jnp.float32),
        "gamma1": jnp.ones((1, node_dim), jnp.float32),
        "beta1": jnp.zeros((1, node_dim), jnp.float32),
        "eps2": jnp.zeros((1, 1), jnp.float32),
        "w2a": lin(keys[8], node_dim, node_dim),
        "b2a": 0.02 * jnp.ones((1, node_dim), jnp.float32),
        "w2b": lin(keys[9], node_dim, node_dim),
        "b2b": -0.02 * jnp.ones((1, node_dim), jnp.float32),
        "gamma2": jnp.ones((1, node_dim), jnp.float32),
        "beta2": jnp.zeros((1, node_dim), jnp.float32),
    }

    out = residual_block(x, edge_index, edge_attr, node2graph, num_graphs,
                         params, edge_tile=8)   # small tile -> exercises the grid
    out = jax.block_until_ready(out)

    ref = _ref(x, edge_index, edge_attr, node2graph, num_graphs, params)
    assert out.shape == (num_nodes, node_dim)
    assert jnp.allclose(out, ref, atol=2e-3, rtol=2e-3), "mismatch vs reference"

    print("KERNEL_OK")
</pallas_src>

<mosaic_0001>
module attributes {stable_mosaic.version = 11 : i64} {
  func.func @_aggregate_kernel(%arg0: i32, %arg1: memref<24xi32, #tpu.memory_space<smem>>, %arg2: memref<24xi32, #tpu.memory_space<smem>>, %arg3: memref<16x128xf32, #tpu.memory_space<vmem>>, %arg4: memref<8x128xf32, #tpu.memory_space<vmem>>, %arg5: memref<16x128xf32, #tpu.memory_space<vmem>>) attributes {dimension_semantics = [#tpu.dimension_semantics<arbitrary>], iteration_bounds = array<i64: 3>, scalar_prefetch = 2 : i64, scratch_operands = 0 : i64, tpu.core_type = #tpu.core_type<tc>, window_params = [{pipeline_mode = #tpu.pipeline_mode<synchronous>, transform_indices = @transform_0, window_bounds = array<i64: 16, 128>}, {transform_indices = @transform_1, window_bounds = array<i64: 8, 128>}, {pipeline_mode = #tpu.pipeline_mode<synchronous>, transform_indices = @transform_2, window_bounds = array<i64: 16, 128>}]} {
    %c0_i32 = arith.constant 0 : i32
    %0 = arith.cmpi eq, %arg0, %c0_i32 : i32
    %1 = arith.extui %0 : i1 to i32
    %c0_i32_0 = arith.constant 0 : i32
    %2 = arith.cmpi ne, %1, %c0_i32_0 : i32
    scf.if %2 {
      %cst = arith.constant 0.000000e+00 : f32
      %5 = vector.broadcast %cst : f32 to vector<16x128xf32>
      %c0 = arith.constant 0 : index
      %c0_4 = arith.constant 0 : index
      %6 = vector.load %arg5[%c0, %c0_4] : memref<16x128xf32, #tpu.memory_space<vmem>>, vector<16x128xf32>
      tpu.vector_store %arg5[%c0, %c0_4], %5 {strides = array<i32>} : memref<16x128xf32, #tpu.memory_space<vmem>>, vector<16x128xf32>,
    } else {
    }
    %c8_i32 = arith.constant 8 : i32
    %3 = arith.muli %arg0, %c8_i32 : i32
    %c0_i32_1 = arith.constant 0 : i32
    %c8_i32_2 = arith.constant 8 : i32
    %4 = arith.addi %c0_i32_1, %c8_i32_2 : i32
    %c1_i32 = arith.constant 1 : i32
    scf.for %arg6 = %c0_i32_1 to %4 step %c1_i32  : i32 {
      %5 = arith.addi %3, %arg6 : i32
      %c22_i32 = arith.constant 22 : i32
      %6 = arith.cmpi slt, %5, %c22_i32 : i32
      %7 = arith.extui %6 : i1 to i32
      %c0_i32_4 = arith.constant 0 : i32
      %8 = arith.cmpi ne, %7, %c0_i32_4 : i32
      scf.if %8 {
        %9 = arith.index_cast %5 : i32 to index
        %10 = memref.load %arg1[%9] : memref<24xi32, #tpu.memory_space<smem>>
        %11 = arith.index_cast %5 : i32 to index
        %12 = memref.load %arg2[%11] : memref<24xi32, #tpu.memory_space<smem>>
        %13 = arith.index_cast %10 : i32 to index
        %c0 = arith.constant 0 : index
        %14 = vector.load %arg3[%13, %c0] : memref<16x128xf32, #tpu.memory_space<vmem>>, vector<1x128xf32>
        %15 = arith.index_cast %arg6 : i32 to index
        %c0_5 = arith.constant 0 : index
        %16 = vector.load %arg4[%15, %c0_5] : memref<8x128xf32, #tpu.memory_space<vmem>>, vector<1x128xf32>
        %17 = arith.addf %14, %16 : vector<1x128xf32>
        %cst = arith.constant 0.000000e+00 : f32
        %18 = vector.broadcast %cst : f32 to vector<1x128xf32>
        %19 = arith.maximumf %17, %18 : vector<1x128xf32>
        %20 = arith.index_cast %12 : i32 to index
        %c0_6 = arith.constant 0 : index
        %21 = vector.load %arg5[%20, %c0_6] : memref<16x128xf32, #tpu.memory_space<vmem>>, vector<1x128xf32>
        %22 = arith.addf %21, %19 : vector<1x128xf32>
        %23 = arith.index_cast %12 : i32 to index
        %c0_7 = arith.constant 0 : index
        %24 = vector.load %arg5[%23, %c0_7] : memref<16x128xf32, #tpu.memory_space<vmem>>, vector<1x128xf32>
        tpu.vector_store %arg5[%23, %c0_7], %22 {strides = array<i32>} : memref<16x128xf32, #tpu.memory_space<vmem>>, vector<1x128xf32>,
      } else {
      }
    }
    %c8_i32_3 = arith.constant 8 : i32
    return
  }
  func.func @transform_0(%arg0: i32, %arg1: memref<24xi32, #tpu.memory_space<smem>>, %arg2: memref<24xi32, #tpu.memory_space<smem>>) -> (i32, i32) {
    %c0_i32 = arith.constant 0 : i32
    %c0_i32_0 = arith.constant 0 : i32
    %c0_i32_1 = arith.constant 0 : i32
    return %c0_i32, %c0_i32_0 : i32, i32
  }
  func.func @transform_1(%arg0: i32, %arg1: memref<24xi32, #tpu.memory_space<smem>>, %arg2: memref<24xi32, #tpu.memory_space<smem>>) -> (i32, i32) {
    %c0_i32 = arith.constant 0 : i32
    %c0_i32_0 = arith.constant 0 : i32
    return %arg0, %c0_i32 : i32, i32
  }
  func.func @transform_2(%arg0: i32, %arg1: memref<24xi32, #tpu.memory_space<smem>>, %arg2: memref<24xi32, #tpu.memory_space<smem>>) -> (i32, i32) {
    %c0_i32 = arith.constant 0 : i32
    %c0_i32_0 = arith.constant 0 : i32
    %c0_i32_1 = arith.constant 0 : i32
    return %c0_i32, %c0_i32_0 : i32, i32
  }
}

</mosaic_0001>

<llo_original>
// kernel: tpu_custom_call.1
$region0: #{tpu_custom_call.1}
  #allocation0 [shape = 'u32[]', space=smem, size = 0x4, offset = 0x4, fixed_abs, tag = 'smem constant byte address 0x4 - core index']
  #allocation1 [shape = 'u32[144,128]{1,0:T(1,128)}', space=vmem, size = 0x12000, scoped, tag = 'internal scratch']
  #allocation2 [shape = 's32[1]{0}', space=sflag, size = 0x4, scoped, tag = 'scoped memory for tpu_custom_call.1']
  #allocation3 [shape = 'u8[512]{0}', space=smem, size = 0x200, scoped, tag = 'prefetched SMEM operand 0']
  #allocation4 [shape = 'u8[512]{0}', space=smem, size = 0x200, scoped, tag = 'prefetched SMEM operand 1']
  %s0 = inlined_call_operand.hbm [shape: s32[24], index: 0, kind: input, shape index: {}]
  %s1 = inlined_call_operand.vmem [shape: s32[24], index: 1, kind: input, shape index: {}]
  %s2 = inlined_call_operand.hbm [shape: f32[16,128], index: 2, kind: input, shape index: {}]
  %s3 = inlined_call_operand.hbm [shape: f32[24,128], index: 3, kind: input, shape index: {}]
  %s4 = inlined_call_operand.hbm [shape: f32[16,128], index: 4, kind: output, shape index: {}]
  %s5 = sld [smem:[#allocation0]]
  $region64: #{tpu_custom_call.1} parent=0
    _
  %s7 = ssub.s32 1, %s5
  %s8 = scalar_select 0, %s7, %s5
  %10 = dma.hbm_to_smem %s0, 16, [#allocation3], [#allocation2]
  %s11 = sshll.u32 %s1, 4
  %s12 = int_to_ptr.vmem [resolvable:$true] %s11
  %14 = dma.vmem_to_smem %s12, 16, [#allocation4], [#allocation2]
  %15 = dma.done [#allocation2], 32
  %16 = sfence
  $region1: #{tpu_custom_call.1} parent=0
    #allocation5 [shape = 'u8[8192]{0}', space=vmem, size = 0x2000, scoped, tag = 'input window, operand 2, single buffered']
    #allocation6 [shape = 's32[2]{0}', space=sflag, size = 0x8, scoped, tag = 'scoped memory for tpu_custom_call.1']
    #allocation7 [shape = 's32[2]{0}', space=sflag, size = 0x8, scoped, tag = 'scoped memory for tpu_custom_call.1']
    #allocation8 [shape = 'u8[8192]{0}', space=vmem, size = 0x2000, scoped, tag = 'input window, operand 3']
    #allocation9 [shape = 's32[2]{0}', space=sflag, size = 0x8, scoped, tag = 'scoped memory for tpu_custom_call.1']
    #allocation10 [shape = 'u8[8192]{0}', space=vmem, size = 0x2000, scoped, tag = 'output window, operand 0, single buffered']
    %17 = vsyncpa [#allocation6], 0
    %18 = vsyncpa [#allocation9], 0
    %s19 = scalar_lea.sflag [#allocation9], 1
    %20 = vsyncpa %s19, 0
    %21 = vsyncpa [#allocation7], 0
    loop: start=0, step=1, limit=5
    $region2: #{tpu_custom_call.1} parent=1 // loop_pre_header
      _
    $region3: #{tpu_custom_call.1} parent=1 // loop_header
      %s23 = sphi 0, %s27
      %p24 = scmp.ge.s32.totalorder %s23, 5
      %s31 = sphi 0, %s31
      %s33 = sphi 0, %s31
      %s34 = sphi 0, %s33
      %s48 = sphi 0, %s34
      %s54 = sphi 0, %s56
      %s57 = sphi 0, %s54
      %s58 = sphi 0, %s57
      %s74 = sphi 0, %s58
      %s78 = sphi 0, %s78
      %s80 = sphi 0, %s78
      %s81 = sphi 0, %s80
      %s95 = sphi 0, %s81
    $region4: #{tpu_custom_call.1} parent=1 // loop_header_branch
      %26 = sbr.rel (%p24) target = $region8
    $region5: #{tpu_custom_call.1} parent=1 // loop_body
      %s28 = ssub.s32 %s23, 1
      %s29 = ssub.s32 %s23, 2
      %s30 = sadd.s32 %s23, 1
      %s32 = sadd.s32 %s31, 1
      %p35 = scmp.eq.s32.totalorder %s23, 2
      %p36 = scmp.ne.s32.totalorder %s31, %s33
      %p37 = scmp.eq.s32.totalorder %s23, 0
      %p38 = por %p36, %p37
      %p39 = scmp.ne.s32.totalorder %s31, %s33
      %p40 = scmp.eq.s32.totalorder %s28, 2
      %p41 = por %p39, %p40
      %p42 = scmp.ne.s32.totalorder %s33, %s34
      %p43 = scmp.eq.s32.totalorder %s28, 0
      %p44 = por %p42, %p43
      %p45 = scmp.ne.s32.totalorder %s33, %s34
      %p46 = scmp.eq.s32.totalorder %s29, 2
      %p47 = por %p45, %p46
      %p49 = scmp.ne.s32.totalorder %s34, %s48
      %p50 = scmp.eq.s32.totalorder %s29, 0
      %p51 = por %p49, %p50
      %s52 = ssub.s32 %s23, %s30
      %p53 = scmp.eq.s32.totalorder %s52, 0
      %s55 = sadd.s32 %s54, 1
      %s56 = scalar_select %p53, %s54, %s55
      %p59 = pneg %p53
      %p60 = scmp.eq.s32.totalorder %s23, 2
      %p61 = por %p59, %p60
      %p62 = scmp.ne.s32.totalorder %s54, %s57
      %p63 = scmp.eq.s32.totalorder %s23, 0
      %p64 = por %p62, %p63
      %p65 = scmp.ne.s32.totalorder %s54, %s57
      %p66 = scmp.eq.s32.totalorder %s28, 2
      %p67 = por %p65, %p66
      %p68 = scmp.ne.s32.totalorder %s57, %s58
      %p69 = scmp.eq.s32.totalorder %s28, 0
      %p70 = por %p68, %p69
      %p71 = scmp.ne.s32.totalorder %s57, %s58
      %p72 = scmp.eq.s32.totalorder %s29, 2
      %p73 = por %p71, %p72
      %p75 = scmp.ne.s32.totalorder %s58, %s74
      %p76 = scmp.eq.s32.totalorder %s29, 0
      %p77 = por %p75, %p76
      %s79 = sadd.s32 %s78, 1
      %p82 = scmp.eq.s32.totalorder %s23, 2
      %p83 = scmp.ne.s32.totalorder %s78, %s80
      %p84 = scmp.eq.s32.totalorder %s23, 0
      %p85 = por %p83, %p84
      %p86 = scmp.ne.s32.totalorder %s78, %s80
      %p87 = scmp.eq.s32.totalorder %s28, 2
      %p88 = por %p86, %p87
      %p89 = scmp.ne.s32.totalorder %s80, %s81
      %p90 = scmp.eq.s32.totalorder %s28, 0
      %p91 = por %p89, %p90
      %p92 = scmp.ne.s32.totalorder %s80, %s81
      %p93 = scmp.eq.s32.totalorder %s29, 2
      %p94 = por %p92, %p93
      %p96 = scmp.ne.s32.totalorder %s81, %s95
      %p97 = scmp.eq.s32.totalorder %s29, 0
      %p98 = por %p96, %p97
      %p99 = scmp.le.s32.totalorder 1, %s23
      %p100 = scmp.lt.s32.totalorder %s23, 4
      %p101 = pnand %p99, %p100
      %p102 = pneg %p101
      // Predicated region
      $region9: #{tpu_custom_call.1} parent=5 // pred_check
        _
      $region10: #{tpu_custom_call.1} parent=5 // pred_check_branch
        %104 = sbr.rel (%p101) target = $region12
      $region11: #{tpu_custom_call.1} parent=5 // pred_region
        %s105 = ssub.s32 %s23, 1
        // Predicated region
        $region13: #{tpu_custom_call.1} parent=11 // pred_check
          %p106 = pneg %p44
        $region14: #{tpu_custom_call.1} parent=11 // pred_check_branch
          %108 = sbr.rel (%p106) target = $region16
        $region15: #{tpu_custom_call.1} parent=11 // pred_region
          %s110 = ssub.s32 256, 256
          %111 = vsyncadd [#allocation6], %s110
          %s112 = sshll.u32 [#allocation5], 4
          %s113 = int_to_ptr.vmem [resolvable:$true] %s112
          %118 = dma.hbm_to_vmem [thread:$0]  %s2, 256, %s113, [#allocation6], 128, 128, 8
        $region16: #{tpu_custom_call.1} parent=11 // pred_fallthru
          _
      $region12: #{tpu_custom_call.1} parent=5 // pred_fallthru
        _
      %p119 = scmp.lt.s32.totalorder %s23, 3
      // Predicated region
      $region17: #{tpu_custom_call.1} parent=5 // pred_check
        %p120 = pneg %p119
      $region18: #{tpu_custom_call.1} parent=5 // pred_check_branch
        %122 = sbr.rel (%p120) target = $region20
      $region19: #{tpu_custom_call.1} parent=5 // pred_region
        // Predicated region
        $region21: #{tpu_custom_call.1} parent=19 // pred_check
          %p123 = pneg %p64
        $region22: #{tpu_custom_call.1} parent=19 // pred_check_branch
          %125 = sbr.rel (%p123) target = $region24
        $region23: #{tpu_custom_call.1} parent=19 // pred_region
          %s126 = sand.u32 %s54, 1
          %s127 = scalar_lea.sflag [#allocation9], %s126
          %s128 = sand.u32 %s54, 1
          %s129 = smul.addr %s128, 8
          %s130 = scalar_lea.vmem [#allocation8], %s129
          %s132 = ssub.s32 128, 128
          %133 = vsyncadd %s127, %s132
          %s134 = smul.addr %s23, 128
          %s135 = scalar_lea.hbm %s3, %s134
          %s137 = sshll.u32 %s130, 4
          %s138 = int_to_ptr.vmem [resolvable:$true] %s137
          %140 = dma.hbm_to_vmem [thread:$0]  %s135, 128, %s138, %s127
        $region24: #{tpu_custom_call.1} parent=19 // pred_fallthru
          _
      $region20: #{tpu_custom_call.1} parent=5 // pred_fallthru
        _
      %p141 = scmp.le.s32.totalorder 1, %s23
      %p142 = scmp.lt.s32.totalorder %s23, 4
      %p143 = pnand %p141, %p142
      %p144 = pneg %p143
      // Predicated region
      $region25: #{tpu_custom_call.1} parent=5 // pred_check
        _
      $region26: #{tpu_custom_call.1} parent=5 // pred_check_branch
        %146 = sbr.rel (%p143) target = $region28
      $region27: #{tpu_custom_call.1} parent=5 // pred_region
        %s147 = ssub.s32 %s23, 1
        // Predicated region
        $region29: #{tpu_custom_call.1} parent=27 // pred_check
          %p148 = pneg %p44
        $region30: #{tpu_custom_call.1} parent=27 // pred_check_branch
          %150 = sbr.rel (%p148) target = $region32
        $region31: #{tpu_custom_call.1} parent=27 // pred_region
          %151 = dma.done [#allocation6], 256
        $region32: #{tpu_custom_call.1} parent=27 // pred_fallthru
          _
        %s152 = sand.u32 %s57, 1
        %s153 = scalar_lea.sflag [#allocation9], %s152
        %s154 = sand.u32 %s57, 1
        %s155 = smul.addr %s154, 8
        %s156 = scalar_lea.vmem [#allocation8], %s155
        // Predicated region
        $region33: #{tpu_custom_call.1} parent=27 // pred_check
          %p157 = pneg %p70
        $region34: #{tpu_custom_call.1} parent=27 // pred_check_branch
          %159 = sbr.rel (%p157) target = $region36
        $region35: #{tpu_custom_call.1} parent=27 // pred_region
          %160 = dma.done %s153, 128
        $region36: #{tpu_custom_call.1} parent=27 // pred_fallthru
          _
        %p161 = pneg %p44
        %p162 = pneg %p41
        %s163 = sand.u32 %s57, 1
        %s164 = scalar_lea.sflag [#allocation9], %s163
        %s165 = sand.u32 %s57, 1
        %s166 = smul.addr %s165, 8
        %s167 = scalar_lea.vmem [#allocation8], %s166
        %p168 = pneg %p70
        %p169 = pneg %p67
        %p170 = pneg %p91
        %p171 = pneg %p88
        %p172 = scmp.eq.s32.totalorder %s28, 0
        // Predicated region
        $region37: #{tpu_custom_call.1} parent=27 // pred_check
          %p173 = pneg %p172
        $region38: #{tpu_custom_call.1} parent=27 // pred_check_branch
          %175 = sbr.rel (%p173) target = $region40
        $region39: #{tpu_custom_call.1} parent=27 // pred_region
          %176 = vst [vmem:[#allocation10] sm:$0xff] 0.0
          %177 = vst [vmem:[#allocation10 + $0x8] sm:$0xff] 0.0
        $region40: #{tpu_custom_call.1} parent=27 // pred_fallthru
          _
        %s178 = smul.u32 %s28, 8
        loop: start=0, step=1, limit=8
        $region41: #{tpu_custom_call.1} parent=27 // loop_pre_header
          _
        $region42: #{tpu_custom_call.1} parent=27 // loop_header
          %s180 = sphi 0, %s184
          %p181 = scmp.ge.s32.totalorder %s180, 8
        $region43: #{tpu_custom_call.1} parent=27 // loop_header_branch
          %183 = sbr.rel (%p181) target = $region47
        $region44: #{tpu_custom_call.1} parent=27 // loop_body
          %s185 = sadd.s32 %s178, %s180
          %p186 = scmp.lt.s32.totalorder %s185, 22
          // Predicated region
          $region48: #{tpu_custom_call.1} parent=44 // pred_check
            %p187 = pneg %p186
          $region49: #{tpu_custom_call.1} parent=44 // pred_check_branch
            %189 = sbr.rel (%p187) target = $region51
          $region50: #{tpu_custom_call.1} parent=44 // pred_region
            %s190 = sld [smem:[#allocation3 + %s185]]
            %s191 = sld [smem:[#allocation4 + %s185]]
            %s192 = scalar_lea.vmem [#allocation5], %s190
            %v193 = vld [vmem:[%s192] sm:$0x1]
            %s194 = scalar_lea.vmem %s156, %s180 [#allocation8]
            %v195 = vld [vmem:[%s194] sm:$0x1]
            %v196 = vadd.f32 %v193, %v195
            %v197 = vmax.f32 %v196, 0.0
            %s198 = scalar_lea.vmem [#allocation10], %s191
            %v199 = vld [vmem:[%s198] sm:$0x1]
            %v200 = vadd.f32 %v199, %v197
            %201 = vst [vmem:[%s198] sm:$0x1] %v200
          $region51: #{tpu_custom_call.1} parent=44 // pred_fallthru
            _
        $region45: #{tpu_custom_call.1} parent=27 // loop_footer
          %s184 = sadd.s32 1, %s180
        $region46: #{tpu_custom_call.1} parent=27 // loop_footer_branch
          %179 = sbr.rel target = $region42
        $region47: #{tpu_custom_call.1} parent=27 // loop_exit
          _
        // Predicated region
        $region52: #{tpu_custom_call.1} parent=27 // pred_check
          %p202 = pneg %p88
        $region53: #{tpu_custom_call.1} parent=27 // pred_check_branch
          %204 = sbr.rel (%p202) target = $region55
        $region54: #{tpu_custom_call.1} parent=27 // pred_region
          %s206 = ssub.s32 256, 256
          %207 = vsyncadd [#allocation7], %s206
          %s208 = sshll.u32 [#allocation10], 4
          %s209 = int_to_ptr.vmem [resolvable:$true] %s208
          %214 = dma.vmem_to_hbm [thread:$0]  %s209, 256, %s4, [#allocation7], 128, 128, 8
        $region55: #{tpu_custom_call.1} parent=27 // pred_fallthru
          _
        // Predicated region
        $region56: #{tpu_custom_call.1} parent=27 // pred_check
          %p215 = pneg %p88
        $region57: #{tpu_custom_call.1} parent=27 // pred_check_branch
          %217 = sbr.rel (%p215) target = $region59
        $region58: #{tpu_custom_call.1} parent=27 // pred_region
          %218 = dma.done [#allocation7], 256
        $region59: #{tpu_custom_call.1} parent=27 // pred_fallthru
          _
      $region28: #{tpu_custom_call.1} parent=5 // pred_fallthru
        _
      %p219 = scmp.le.s32.totalorder 2, %s23
      // Predicated region
      $region60: #{tpu_custom_call.1} parent=5 // pred_check
        %p220 = pneg %p219
      $region61: #{tpu_custom_call.1} parent=5 // pred_check_branch
        %222 = sbr.rel (%p220) target = $region63
      $region62: #{tpu_custom_call.1} parent=5 // pred_region
        %s223 = ssub.s32 %s23, 2
      $region63: #{tpu_custom_call.1} parent=5 // pred_fallthru
        _
    $region6: #{tpu_custom_call.1} parent=1 // loop_footer
      %s27 = sadd.s32 1, %s23
    $region7: #{tpu_custom_call.1} parent=1 // loop_footer_branch
      %22 = sbr.rel target = $region3
    $region8: #{tpu_custom_call.1} parent=1 // loop_exit
      _
    %224 = vsyncpa [#allocation6], 1
    %s225 = scalar_lea.sflag [#allocation6], 1
    %226 = vsyncpa %s225, 1
    %227 = vsyncpa [#allocation9], 1
    %s228 = scalar_lea.sflag [#allocation9], 1
    %229 = vsyncpa %s228, 1
    %230 = vsyncpa [#allocation7], 1
    %s231 = scalar_lea.sflag [#allocation7], 1
    %232 = vsyncpa %s231, 1

</llo_original>
